<compile_context>
chip_gen: v6e
topology: v6e:2x2x1
jax: 0.10.0
libtpu: 0.0.40
codegen_flags: <defaults>
</compile_context>

<pallas_src>
import math
import numpy as np
import jax
import jax.numpy as jnp
from jax.experimental import pallas as pl
from jax.experimental.pallas import tpu as pltpu

LANE = 128
SUBLANE = 8


def _round_up(x: int, m: int) -> int:
    return ((x + m - 1) // m) * m


def _tpu_hw_info():
    """Best-effort query of VMEM capacity and TensorCore count, with safe fallbacks."""
    vmem_bytes = 64 << 20          # conservative default (v7x has the smallest VMEM)
    num_cores = 1
    try:
        info = pltpu.get_tpu_info()
        v = int(getattr(info, "vmem_capacity_bytes", 0) or 0)
        if v > 0:
            vmem_bytes = v
        for attr in ("num_tensorcores", "tensorcores_per_chip", "num_cores",
                     "cores_per_chip"):
            c = getattr(info, attr, None)
            if isinstance(c, int) and c > 0:
                num_cores = c
                break
    except Exception:
        pass
    return vmem_bytes, num_cores


# ------------------------------------------------------------------ kernel ---

def make_masked_mlp_kernel(num_layers: int, negative_slope: float = 0.01):
    """Kernel arg order: x_ref, (wt_ref, b_ref) * num_layers, out_ref.

    wt_ref holds the pre-masked, pre-transposed, zero-padded weight (in_p, out_p) in bf16;
    b_ref holds the zero-padded bias (1, out_p) in f32.
    """

    def kernel(*refs):
        x_ref = refs[0]
        o_ref = refs[-1]
        param_refs = refs[1:-1]

        h = x_ref[...]                                   # bf16 activation tile
        for l in range(num_layers):
            wt_ref = param_refs[2 * l]
            b_ref = param_refs[2 * l + 1]
            # MXU: bf16 x bf16 -> f32 accumulate; epilogue in f32.
            acc = jnp.dot(h, wt_ref[...], preferred_element_type=jnp.float32)
            acc = acc + b_ref[...]
            if l < num_layers - 1:
                acc = jnp.maximum(acc, acc * negative_slope)   # LeakyReLU, 0<slope<1
                h = acc.astype(jnp.bfloat16)             # downcast only at the dot boundary
            else:
                h = acc
        o_ref[...] = h.astype(o_ref.dtype)

    return kernel


# ------------------------------------------------- one-time parameter prep ---

def prepare_masked_mlp_params(weights, biases, masks):
    """Hoisted out of the forward path: mask, transpose, zero-pad, cast once.

    Returns (params, dims, dims_p) where params = [wt_p0, b_p0, wt_p1, b_p1, ...].
    """
    d_in = int(weights[0].shape[1])
    dims = [d_in] + [int(w.shape[0]) for w in weights]   # [d_in, h1, ..., d_out]
    dims_p = [_round_up(d, LANE) for d in dims]          # lane-dense padded feature dims

    params = []
    for l, (w, b, m) in enumerate(zip(weights, biases, masks)):
        wt = (jnp.asarray(m) * jnp.asarray(w)).T         # masked + transposed: (in_l, out_l)
        wt_p = jnp.pad(wt, ((0, dims_p[l] - wt.shape[0]),
                            (0, dims_p[l + 1] - wt.shape[1]))).astype(jnp.bfloat16)
        b_p = jnp.pad(jnp.asarray(b).reshape(1, -1).astype(jnp.float32),
                      ((0, 0), (0, dims_p[l + 1] - b.shape[0])))
        params += [wt_p, b_p]
    return params, dims, dims_p


# ----------------------------------------------------------------- wrapper ---

def masked_mlp_forward(x, prepared, *, block_batch: int | None = None,
                       negative_slope: float = 0.01, out_dtype=jnp.float32,
                       unpad: bool = True):
    """x: (B, d_in). `prepared` comes from prepare_masked_mlp_params().

    Set unpad=False (and/or out_dtype=bf16) to skip the post-kernel slice copy / halve
    output HBM writeback when the consumer accepts the padded layout.
    """
    params, dims, dims_p = prepared
    num_layers = len(params) // 2
    B, d_in = x.shape
    assert d_in == dims[0], f"expected d_in={dims[0]}, got {d_in}"
    d_in_p, d_out, d_out_p = dims_p[0], dims[-1], dims_p[-1]

    vmem_bytes, num_cores = _tpu_hw_info()
    vmem_cap = max(vmem_bytes - (16 << 20), 24 << 20)    # keep Mosaic headroom

    # --- generation-aware batch tiling ---------------------------------------
    if block_batch is None:
        if num_cores >= 2 and B > SUBLANE:
            # Split into an even number of steps so both TensorCores get equal work.
            steps = max(2, 2 * ((B + 2 * 1024 - 1) // (2 * 1024)))
            block_batch = _round_up(-(-B // steps), SUBLANE)
        else:
            # Single TC: one big tile (up to 1024 rows) -> no per-step overhead.
            block_batch = _round_up(min(max(B, SUBLANE), 1024), SUBLANE)
    block_batch = max(SUBLANE, _round_up(block_batch, SUBLANE))

    # --- VMEM budget (params single-buffered; x/out double-buffered; temps) ---
    param_bytes = sum(int(p.size) * p.dtype.itemsize for p in params)
    out_itemsize = np.dtype(out_dtype).itemsize
    max_f = max(dims_p)

    def budget(bb, param_factor):
        x_tiles = 2 * bb * d_in_p * 2                    # bf16 input tiles, 2 buffers
        out_tiles = 2 * bb * d_out_p * out_itemsize      # output tiles, 2 buffers
        inter = 2 * bb * max_f * (4 + 2)                 # f32 acc + bf16 h temps (slack x2)
        return param_factor * param_bytes + x_tiles + out_tiles + inter + (4 << 20)

    while budget(block_batch, 1) > vmem_cap and block_batch > SUBLANE:
        block_batch = max(SUBLANE, _round_up(block_batch // 2, SUBLANE))
    # TODO(synk): if params alone exceed vmem_cap, column-tile the largest layer with an
    # inner pltpu.emit_pipeline instead of shrinking block_batch further.

    B_pad = _round_up(B, block_batch)
    x_p = jnp.pad(x.astype(jnp.bfloat16), ((0, B_pad - B), (0, d_in_p - d_in)))

    def run(single_buffer_params: bool):
        in_specs = [pl.BlockSpec((block_batch, d_in_p), lambda i: (i, 0))]
        for p in params:
            if single_buffer_params:
                # Grid-invariant operand: one resident buffer, DMA'd once.
                in_specs.append(pl.BlockSpec(p.shape, lambda i: (0, 0),
                                             pipeline_mode=pl.Buffered(1)))
            else:
                in_specs.append(pl.BlockSpec(p.shape, lambda i: (0, 0)))

        vmem_limit = int(min(
            max(budget(block_batch, 1 if single_buffer_params else 2), 16 << 20),
            vmem_cap))

        return pl.pallas_call(
            make_masked_mlp_kernel(num_layers, negative_slope),
            out_shape=jax.ShapeDtypeStruct((B_pad, d_out_p), out_dtype),
            grid=(B_pad // block_batch,),
            in_specs=in_specs,
            out_specs=pl.BlockSpec((block_batch, d_out_p), lambda i: (i, 0)),
            compiler_params=pltpu.CompilerParams(
                dimension_semantics=("parallel",),
                vmem_limit_bytes=vmem_limit,
            ),
        )(x_p, *params)

    try:
        out = run(single_buffer_params=True)
    except Exception:
        # pl.Buffered(1) not accepted by this jax version -> default double buffering.
        out = run(single_buffer_params=False)

    if unpad:
        return out[:B, :d_out]                           # strip batch + lane padding
    return out


# ------------------------------------------------------- parameter building ---

def build_masked_mlp_params(input_dims, output_dims, layers, nodes_per_feature, key):
    """Degrees / masks exactly as in MaskedMLP.__init__ (deg_out >= deg_in per layer)."""
    in_degrees = np.concatenate(
        [np.full(d, i, dtype=np.int32) for i, d in enumerate(input_dims)])
    hidden_degrees = np.repeat(np.arange(len(input_dims), dtype=np.int32),
                               nodes_per_feature)
    out_degrees = np.concatenate(
        [np.full(d, i, dtype=np.int32) for i, d in enumerate(output_dims)])

    layer_degrees = [in_degrees] + [hidden_degrees] * (layers - 1) + [out_degrees]

    masks, weights, biases = [], [], []
    for deg_in, deg_out in zip(layer_degrees[:-1], layer_degrees[1:]):
        masks.append(jnp.asarray(
            (deg_out[:, None] >= deg_in[None, :]).astype(np.float32)))
        fan_in = len(deg_in)
        bound = 1.0 / math.sqrt(fan_in)   # kaiming_uniform(a=sqrt(5)) bound == 1/sqrt(fan_in)
        key, kw, kb = jax.random.split(key, 3)
        weights.append(jax.random.uniform(
            kw, (len(deg_out), len(deg_in)), jnp.float32, -bound, bound))
        biases.append(jax.random.uniform(
            kb, (len(deg_out),), jnp.float32, -bound, bound))
    # Note: the PyTorch module zero-inits the last layer (reset_parameters), which would
    # make the output trivially zero; deterministic random init keeps the kernel
    # computation non-trivial and checkable. Forward-pass structure is unchanged.
    return weights, biases, masks


# ------------------------------------------------------------- references ---

def ref_forward_f32(x, weights, biases, masks, negative_slope=0.01):
    """Exact f32 reference (same structure as MaskedMLP.forward)."""
    h = x.astype(jnp.float32)
    for l, (w, b, m) in enumerate(zip(weights, biases, masks)):
        h = h @ (m * w).T + b
        if l < len(weights) - 1:
            h = jnp.where(h > 0, h, negative_slope * h)
    return h


def ref_forward_bf16(x, weights, biases, masks, negative_slope=0.01):
    """Reference matching the kernel numerics (bf16 MXU operands, f32 accumulate/epilogue)."""
    h = x.astype(jnp.bfloat16)
    for l, (w, b, m) in enumerate(zip(weights, biases, masks)):
        wt = (m * w).T.astype(jnp.bfloat16)
        h = jnp.dot(h, wt, preferred_element_type=jnp.float32) + b.astype(jnp.float32)
        if l < len(weights) - 1:
            h = jnp.where(h > 0, h, negative_slope * h).astype(jnp.bfloat16)
    return h.astype(jnp.float32)


# -------------------------------------------------------------------- main ---

if __name__ == "__main__":
    input_dims = [2, 3]          # d_in  = 5
    output_dims = [2, 3]         # d_out = 5
    layers = 3
    nodes_per_feature = 8        # hidden dim = 2 * 8 = 16
    batch = 16

    key = jax.random.PRNGKey(0)
    key, kx, kp = jax.random.split(key, 3)

    weights, biases, masks = build_masked_mlp_params(
        input_dims, output_dims, layers, nodes_per_feature, kp)

    d_in = sum(input_dims)
    x = jax.random.normal(kx, (batch, d_in), jnp.float32)

    # One-time parameter prep (mask/transpose/pad/cast), reused across forward calls.
    prepared = prepare_masked_mlp_params(weights, biases, masks)

    out = masked_mlp_forward(x, prepared)
    out = jax.block_until_ready(out)

    # Tight check vs. a reference using the same bf16-at-the-dot numerics.
    ref_bf16 = ref_forward_bf16(x, weights, biases, masks)
    np.testing.assert_allclose(np.asarray(out), np.asarray(ref_bf16),
                               rtol=2e-3, atol=2e-3)
    # Loose semantic check vs. the exact f32 forward of the module.
    ref_f32 = ref_forward_f32(x, weights, biases, masks)
    np.testing.assert_allclose(np.asarray(out), np.asarray(ref_f32),
                               rtol=5e-2, atol=5e-2)

    # TODO(synk): forward_cached (incremental per-feature evaluation with slicing/cache)
    # is not implemented; only the full forward pass is translated.
    print("KERNEL_OK")
</pallas_src>

<mosaic_0001>
module attributes {stable_mosaic.version = 11 : i64} {
  func.func @kernel(%arg0: i32, %arg1: memref<16x128xbf16, #tpu.memory_space<vmem>>, %arg2: memref<128x128xbf16, #tpu.memory_space<vmem>>, %arg3: memref<1x128xf32, #tpu.memory_space<vmem>>, %arg4: memref<128x128xbf16, #tpu.memory_space<vmem>>, %arg5: memref<1x128xf32, #tpu.memory_space<vmem>>, %arg6: memref<128x128xbf16, #tpu.memory_space<vmem>>, %arg7: memref<1x128xf32, #tpu.memory_space<vmem>>, %arg8: memref<16x128xf32, #tpu.memory_space<vmem>>) attributes {dimension_semantics = [#tpu.dimension_semantics<parallel>], iteration_bounds = array<i64: 1>, scalar_prefetch = 0 : i64, scratch_operands = 0 : i64, tpu.core_type = #tpu.core_type<tc>, window_params = [{transform_indices = @transform_0, window_bounds = array<i64: 16, 128>}, {pipeline_mode = #tpu.pipeline_mode<synchronous>, transform_indices = @transform_1, window_bounds = array<i64: 128, 128>}, {pipeline_mode = #tpu.pipeline_mode<synchronous>, transform_indices = @transform_2, window_bounds = array<i64: 1, 128>}, {pipeline_mode = #tpu.pipeline_mode<synchronous>, transform_indices = @transform_3, window_bounds = array<i64: 128, 128>}, {pipeline_mode = #tpu.pipeline_mode<synchronous>, transform_indices = @transform_4, window_bounds = array<i64: 1, 128>}, {pipeline_mode = #tpu.pipeline_mode<synchronous>, transform_indices = @transform_5, window_bounds = array<i64: 128, 128>}, {pipeline_mode = #tpu.pipeline_mode<synchronous>, transform_indices = @transform_6, window_bounds = array<i64: 1, 128>}, {transform_indices = @transform_7, window_bounds = array<i64: 16, 128>}]} {
    %c0 = arith.constant 0 : index
    %c0_0 = arith.constant 0 : index
    %0 = vector.load %arg1[%c0, %c0_0] : memref<16x128xbf16, #tpu.memory_space<vmem>>, vector<16x128xbf16>
    %c0_1 = arith.constant 0 : index
    %c0_2 = arith.constant 0 : index
    %1 = vector.load %arg2[%c0_1, %c0_2] : memref<128x128xbf16, #tpu.memory_space<vmem>>, vector<128x128xbf16>
    %cst = arith.constant dense<0.000000e+00> : vector<16x128xf32>
    %2 = tpu.matmul %0, %1, %cst {dimension_numbers = #tpu.dot_dimension_numbers<[1], [0], [0], [1], [0, 0, 1, 1], [], []>} : vector<16x128xbf16>, vector<128x128xbf16>, vector<16x128xf32> -> vector<16x128xf32>
    %c0_3 = arith.constant 0 : index
    %c0_4 = arith.constant 0 : index
    %3 = vector.load %arg3[%c0_3, %c0_4] : memref<1x128xf32, #tpu.memory_space<vmem>>, vector<1x128xf32>
    %4 = vector.broadcast %3 : vector<1x128xf32> to vector<16x128xf32>
    %5 = arith.addf %2, %4 : vector<16x128xf32>
    %cst_5 = arith.constant 0.00999999977 : f32
    %6 = vector.broadcast %cst_5 : f32 to vector<16x128xf32>
    %7 = arith.mulf %5, %6 : vector<16x128xf32>
    %8 = arith.maximumf %5, %7 : vector<16x128xf32>
    %9 = arith.truncf %8 : vector<16x128xf32> to vector<16x128xbf16>
    %c0_6 = arith.constant 0 : index
    %c0_7 = arith.constant 0 : index
    %10 = vector.load %arg4[%c0_6, %c0_7] : memref<128x128xbf16, #tpu.memory_space<vmem>>, vector<128x128xbf16>
    %cst_8 = arith.constant dense<0.000000e+00> : vector<16x128xf32>
    %11 = tpu.matmul %9, %10, %cst_8 {dimension_numbers = #tpu.dot_dimension_numbers<[1], [0], [0], [1], [0, 0, 1, 1], [], []>} : vector<16x128xbf16>, vector<128x128xbf16>, vector<16x128xf32> -> vector<16x128xf32>
    %c0_9 = arith.constant 0 : index
    %c0_10 = arith.constant 0 : index
    %12 = vector.load %arg5[%c0_9, %c0_10] : memref<1x128xf32, #tpu.memory_space<vmem>>, vector<1x128xf32>
    %13 = vector.broadcast %12 : vector<1x128xf32> to vector<16x128xf32>
    %14 = arith.addf %11, %13 : vector<16x128xf32>
    %cst_11 = arith.constant 0.00999999977 : f32
    %15 = vector.broadcast %cst_11 : f32 to vector<16x128xf32>
    %16 = arith.mulf %14, %15 : vector<16x128xf32>
    %17 = arith.maximumf %14, %16 : vector<16x128xf32>
    %18 = arith.truncf %17 : vector<16x128xf32> to vector<16x128xbf16>
    %c0_12 = arith.constant 0 : index
    %c0_13 = arith.constant 0 : index
    %19 = vector.load %arg6[%c0_12, %c0_13] : memref<128x128xbf16, #tpu.memory_space<vmem>>, vector<128x128xbf16>
    %cst_14 = arith.constant dense<0.000000e+00> : vector<16x128xf32>
    %20 = tpu.matmul %18, %19, %cst_14 {dimension_numbers = #tpu.dot_dimension_numbers<[1], [0], [0], [1], [0, 0, 1, 1], [], []>} : vector<16x128xbf16>, vector<128x128xbf16>, vector<16x128xf32> -> vector<16x128xf32>
    %c0_15 = arith.constant 0 : index
    %c0_16 = arith.constant 0 : index
    %21 = vector.load %arg7[%c0_15, %c0_16] : memref<1x128xf32, #tpu.memory_space<vmem>>, vector<1x128xf32>
    %22 = vector.broadcast %21 : vector<1x128xf32> to vector<16x128xf32>
    %23 = arith.addf %20, %22 : vector<16x128xf32>
    %c0_17 = arith.constant 0 : index
    %c0_18 = arith.constant 0 : index
    %24 = vector.load %arg8[%c0_17, %c0_18] : memref<16x128xf32, #tpu.memory_space<vmem>>, vector<16x128xf32>
    tpu.vector_store %arg8[%c0_17, %c0_18], %23 {strides = array<i32>} : memref<16x128xf32, #tpu.memory_space<vmem>>, vector<16x128xf32>,
    return
  }
  func.func @transform_0(%arg0: i32) -> (i32, i32) {
    %c0_i32 = arith.constant 0 : i32
    %c0_i32_0 = arith.constant 0 : i32
    return %arg0, %c0_i32 : i32, i32
  }
  func.func @transform_1(%arg0: i32) -> (i32, i32) {
    %c0_i32 = arith.constant 0 : i32
    %c0_i32_0 = arith.constant 0 : i32
    %c0_i32_1 = arith.constant 0 : i32
    return %c0_i32, %c0_i32_0 : i32, i32
  }
  func.func @transform_2(%arg0: i32) -> (i32, i32) {
    %c0_i32 = arith.constant 0 : i32
    %c0_i32_0 = arith.constant 0 : i32
    %c0_i32_1 = arith.constant 0 : i32
    return %c0_i32, %c0_i32_0 : i32, i32
  }
  func.func @transform_3(%arg0: i32) -> (i32, i32) {
    %c0_i32 = arith.constant 0 : i32
    %c0_i32_0 = arith.constant 0 : i32
    %c0_i32_1 = arith.constant 0 : i32
    return %c0_i32, %c0_i32_0 : i32, i32
  }
  func.func @transform_4(%arg0: i32) -> (i32, i32) {
    %c0_i32 = arith.constant 0 : i32
    %c0_i32_0 = arith.constant 0 : i32
    %c0_i32_1 = arith.constant 0 : i32
    return %c0_i32, %c0_i32_0 : i32, i32
  }
  func.func @transform_5(%arg0: i32) -> (i32, i32) {
    %c0_i32 = arith.constant 0 : i32
    %c0_i32_0 = arith.constant 0 : i32
    %c0_i32_1 = arith.constant 0 : i32
    return %c0_i32, %c0_i32_0 : i32, i32
  }
  func.func @transform_6(%arg0: i32) -> (i32, i32) {
    %c0_i32 = arith.constant 0 : i32
    %c0_i32_0 = arith.constant 0 : i32
    %c0_i32_1 = arith.constant 0 : i32
    return %c0_i32, %c0_i32_0 : i32, i32
  }
  func.func @transform_7(%arg0: i32) -> (i32, i32) {
    %c0_i32 = arith.constant 0 : i32
    %c0_i32_0 = arith.constant 0 : i32
    return %arg0, %c0_i32 : i32, i32
  }
}

module attributes {stable_mosaic.version = 11 : i64} {
  func.func @kernel(%arg0: i32, %arg1: memref<16x128xbf16, #tpu.memory_space<vmem>>, %arg2: memref<128x128xbf16, #tpu.memory_space<vmem>>, %arg3: memref<1x128xf32, #tpu.memory_space<vmem>>, %arg4: memref<128x128xbf16, #tpu.memory_space<vmem>>, %arg5: memref<1x128xf32, #tpu.memory_space<vmem>>, %arg6: memref<128x128xbf16, #tpu.memory_space<vmem>>, %arg7: memref<1x128xf32, #tpu.memory_space<vmem>>, %arg8: memref<16x128xf32, #tpu.memory_space<vmem>>) attributes {dimension_semantics = [#tpu.dimension_semantics<parallel>], iteration_bounds = array<i64: 1>, scalar_prefetch = 0 : i64, scratch_operands = 0 : i64, tpu.core_type = #tpu.core_type<tc>, window_params = [{transform_indices = @transform_0, window_bounds = array<i64: 16, 128>}, {pipeline_mode = #tpu.pipeline_mode<synchronous>, transform_indices = @transform_1, window_bounds = array<i64: 128, 128>}, {pipeline_mode = #tpu.pipeline_mode<synchronous>, transform_indices = @transform_2, window_bounds = array<i64: 1, 128>}, {pipeline_mode = #tpu.pipeline_mode<synchronous>, transform_indices = @transform_3, window_bounds = array<i64: 128, 128>}, {pipeline_mode = #tpu.pipeline_mode<synchronous>, transform_indices = @transform_4, window_bounds = array<i64: 1, 128>}, {pipeline_mode = #tpu.pipeline_mode<synchronous>, transform_indices = @transform_5, window_bounds = array<i64: 128, 128>}, {pipeline_mode = #tpu.pipeline_mode<synchronous>, transform_indices = @transform_6, window_bounds = array<i64: 1, 128>}, {transform_indices = @transform_7, window_bounds = array<i64: 16, 128>}]} {
    %c0 = arith.constant 0 : index
    %c0_0 = arith.constant 0 : index
    %0 = vector.load %arg1[%c0, %c0_0] : memref<16x128xbf16, #tpu.memory_space<vmem>>, vector<16x128xbf16>
    %c0_1 = arith.constant 0 : index
    %c0_2 = arith.constant 0 : index
    %1 = vector.load %arg2[%c0_1, %c0_2] : memref<128x128xbf16, #tpu.memory_space<vmem>>, vector<128x128xbf16>
    %cst = arith.constant dense<0.000000e+00> : vector<16x128xf32>
    %2 = tpu.matmul %0, %1, %cst {dimension_numbers = #tpu.dot_dimension_numbers<[1], [0], [0], [1], [0, 0, 1, 1], [], []>} : vector<16x128xbf16>, vector<128x128xbf16>, vector<16x128xf32> -> vector<16x128xf32>
    %c0_3 = arith.constant 0 : index
    %c0_4 = arith.constant 0 : index
    %3 = vector.load %arg3[%c0_3, %c0_4] : memref<1x128xf32, #tpu.memory_space<vmem>>, vector<1x128xf32>
    %4 = vector.broadcast %3 : vector<1x128xf32> to vector<16x128xf32>
    %5 = arith.addf %2, %4 : vector<16x128xf32>
    %cst_5 = arith.constant 0.00999999977 : f32
    %6 = vector.broadcast %cst_5 : f32 to vector<16x128xf32>
    %7 = arith.mulf %5, %6 : vector<16x128xf32>
    %8 = arith.maximumf %5, %7 : vector<16x128xf32>
    %9 = arith.truncf %8 : vector<16x128xf32> to vector<16x128xbf16>
    %c0_6 = arith.constant 0 : index
    %c0_7 = arith.constant 0 : index
    %10 = vector.load %arg4[%c0_6, %c0_7] : memref<128x128xbf16, #tpu.memory_space<vmem>>, vector<128x128xbf16>
    %cst_8 = arith.constant dense<0.000000e+00> : vector<16x128xf32>
    %11 = tpu.matmul %9, %10, %cst_8 {dimension_numbers = #tpu.dot_dimension_numbers<[1], [0], [0], [1], [0, 0, 1, 1], [], []>} : vector<16x128xbf16>, vector<128x128xbf16>, vector<16x128xf32> -> vector<16x128xf32>
    %c0_9 = arith.constant 0 : index
    %c0_10 = arith.constant 0 : index
    %12 = vector.load %arg5[%c0_9, %c0_10] : memref<1x128xf32, #tpu.memory_space<vmem>>, vector<1x128xf32>
    %13 = vector.broadcast %12 : vector<1x128xf32> to vector<16x128xf32>
    %14 = arith.addf %11, %13 : vector<16x128xf32>
    %cst_11 = arith.constant 0.00999999977 : f32
    %15 = vector.broadcast %cst_11 : f32 to vector<16x128xf32>
    %16 = arith.mulf %14, %15 : vector<16x128xf32>
    %17 = arith.maximumf %14, %16 : vector<16x128xf32>
    %18 = arith.truncf %17 : vector<16x128xf32> to vector<16x128xbf16>
    %c0_12 = arith.constant 0 : index
    %c0_13 = arith.constant 0 : index
    %19 = vector.load %arg6[%c0_12, %c0_13] : memref<128x128xbf16, #tpu.memory_space<vmem>>, vector<128x128xbf16>
    %cst_14 = arith.constant dense<0.000000e+00> : vector<16x128xf32>
    %20 = tpu.matmul %18, %19, %cst_14 {dimension_numbers = #tpu.dot_dimension_numbers<[1], [0], [0], [1], [0, 0, 1, 1], [], []>} : vector<16x128xbf16>, vector<128x128xbf16>, vector<16x128xf32> -> vector<16x128xf32>
    %c0_15 = arith.constant 0 : index
    %c0_16 = arith.constant 0 : index
    %21 = vector.load %arg7[%c0_15, %c0_16] : memref<1x128xf32, #tpu.memory_space<vmem>>, vector<1x128xf32>
    %22 = vector.broadcast %21 : vector<1x128xf32> to vector<16x128xf32>
    %23 = arith.addf %20, %22 : vector<16x128xf32>
    %c0_17 = arith.constant 0 : index
    %c0_18 = arith.constant 0 : index
    %24 = vector.load %arg8[%c0_17, %c0_18] : memref<16x128xf32, #tpu.memory_space<vmem>>, vector<16x128xf32>
    tpu.vector_store %arg8[%c0_17, %c0_18], %23 {strides = array<i32>} : memref<16x128xf32, #tpu.memory_space<vmem>>, vector<16x128xf32>,
    return
  }
  func.func @transform_0(%arg0: i32) -> (i32, i32) {
    %c0_i32 = arith.constant 0 : i32
    %c0_i32_0 = arith.constant 0 : i32
    return %arg0, %c0_i32 : i32, i32
  }
  func.func @transform_1(%arg0: i32) -> (i32, i32) {
    %c0_i32 = arith.constant 0 : i32
    %c0_i32_0 = arith.constant 0 : i32
    %c0_i32_1 = arith.constant 0 : i32
    return %c0_i32, %c0_i32_0 : i32, i32
  }
  func.func @transform_2(%arg0: i32) -> (i32, i32) {
    %c0_i32 = arith.constant 0 : i32
    %c0_i32_0 = arith.constant 0 : i32
    %c0_i32_1 = arith.constant 0 : i32
    return %c0_i32, %c0_i32_0 : i32, i32
  }
  func.func @transform_3(%arg0: i32) -> (i32, i32) {
    %c0_i32 = arith.constant 0 : i32
    %c0_i32_0 = arith.constant 0 : i32
    %c0_i32_1 = arith.constant 0 : i32
    return %c0_i32, %c0_i32_0 : i32, i32
  }
  func.func @transform_4(%arg0: i32) -> (i32, i32) {
    %c0_i32 = arith.constant 0 : i32
    %c0_i32_0 = arith.constant 0 : i32
    %c0_i32_1 = arith.constant 0 : i32
    return %c0_i32, %c0_i32_0 : i32, i32
  }
  func.func @transform_5(%arg0: i32) -> (i32, i32) {
    %c0_i32 = arith.constant 0 : i32
    %c0_i32_0 = arith.constant 0 : i32
    %c0_i32_1 = arith.constant 0 : i32
    return %c0_i32, %c0_i32_0 : i32, i32
  }
  func.func @transform_6(%arg0: i32) -> (i32, i32) {
    %c0_i32 = arith.constant 0 : i32
    %c0_i32_0 = arith.constant 0 : i32
    %c0_i32_1 = arith.constant 0 : i32
    return %c0_i32, %c0_i32_0 : i32, i32
  }
  func.func @transform_7(%arg0: i32) -> (i32, i32) {
    %c0_i32 = arith.constant 0 : i32
    %c0_i32_0 = arith.constant 0 : i32
    return %arg0, %c0_i32 : i32, i32
  }
}

</mosaic_0001>

<llo_original>
// kernel: tpu_custom_call.1
$region0: #{tpu_custom_call.1}
  #allocation0 [shape = 'u32[]', space=smem, size = 0x4, offset = 0x4, fixed_abs, tag = 'smem constant byte address 0x4 - core index']
  #allocation1 [shape = 'u32[144,128]{1,0:T(1,128)}', space=vmem, size = 0x12000, scoped, tag = 'internal scratch']
  %s0 = inlined_call_operand.hbm [shape: bf16[16,128], index: 0, kind: input, shape index: {}]
  %s1 = inlined_call_operand.hbm [shape: bf16[128,128], index: 1, kind: input, shape index: {}]
  %s2 = inlined_call_operand.vmem [shape: f32[1,128], index: 2, kind: input, shape index: {}]
  %s3 = inlined_call_operand.hbm [shape: bf16[128,128], index: 3, kind: input, shape index: {}]
  %s4 = inlined_call_operand.vmem [shape: f32[1,128], index: 4, kind: input, shape index: {}]
  %s5 = inlined_call_operand.hbm [shape: bf16[128,128], index: 5, kind: input, shape index: {}]
  %s6 = inlined_call_operand.vmem [shape: f32[1,128], index: 6, kind: input, shape index: {}]
  %s7 = inlined_call_operand.hbm [shape: f32[16,128], index: 7, kind: output, shape index: {}]
  %s8 = sld [smem:[#allocation0]]
  $region54: #{tpu_custom_call.1} parent=0
    _
  %s10 = ssub.s32 1, %s8
  %s11 = scalar_select 0, %s10, %s8
  $region1: #{tpu_custom_call.1} parent=0
    #allocation2 [shape = 'u8[4096]{0}', space=vmem, size = 0x1000, scoped, tag = 'input window, operand 0, single buffered']
    #allocation3 [shape = 's32[1]{0}', space=sflag, size = 0x4, scoped, tag = 'scoped memory for tpu_custom_call.1']
    #allocation4 [shape = 's32[1]{0}', space=sflag, size = 0x4, scoped, tag = 'scoped memory for tpu_custom_call.1']
    #allocation5 [shape = 'u8[32768]{0}', space=vmem, size = 0x8000, scoped, tag = 'input window, operand 1, single buffered']
    #allocation6 [shape = 's32[1]{0}', space=sflag, size = 0x4, scoped, tag = 'scoped memory for tpu_custom_call.1']
    #allocation7 [shape = 'u8[32768]{0}', space=vmem, size = 0x8000, scoped, tag = 'input window, operand 3, single buffered']
    #allocation8 [shape = 'u8[32768]{0}', space=vmem, size = 0x8000, scoped, tag = 'input window, operand 5, single buffered']
    #allocation9 [shape = 's32[1]{0}', space=sflag, size = 0x4, scoped, tag = 'scoped memory for tpu_custom_call.1']
    #allocation10 [shape = 'u8[8192]{0}', space=vmem, size = 0x2000, scoped, tag = 'output window, operand 0, single buffered']
    %12 = vsyncpa [#allocation3], 0
    %13 = vsyncpa [#allocation6], 0
    %14 = vsyncpa [#allocation9], 0
    %15 = vsyncpa [#allocation4], 0
    // Predicated region
    $region2: #{tpu_custom_call.1} parent=1 // pred_check
      _
    $region3: #{tpu_custom_call.1} parent=1 // pred_check_branch
      %17 = sbr.rel (0) target = $region5
    $region4: #{tpu_custom_call.1} parent=1 // pred_region
      %s19 = ssub.s32 128, 128
      %20 = vsyncadd [#allocation3], %s19
      %s21 = sshll.u32 [#allocation2], 4
      %s22 = int_to_ptr.vmem [resolvable:$true] %s21
      %27 = dma.hbm_to_vmem [thread:$0]  %s0, 128, %s22, [#allocation3], 64, 64, 4
    $region5: #{tpu_custom_call.1} parent=1 // pred_fallthru
      _
    // Predicated region
    $region6: #{tpu_custom_call.1} parent=1 // pred_check
      _
    $region7: #{tpu_custom_call.1} parent=1 // pred_check_branch
      %29 = sbr.rel (0) target = $region9
    $region8: #{tpu_custom_call.1} parent=1 // pred_region
      %s31 = ssub.s32 1024, 1024
      %32 = vsyncadd [#allocation6], %s31
      %s33 = sshll.u32 [#allocation5], 4
      %s34 = int_to_ptr.vmem [resolvable:$true] %s33
      %39 = dma.hbm_to_vmem [thread:$0]  %s1, 1024, %s34, [#allocation6], 64, 64, 4
    $region9: #{tpu_custom_call.1} parent=1 // pred_fallthru
      _
    // Predicated region
    $region10: #{tpu_custom_call.1} parent=1 // pred_check
      _
    $region11: #{tpu_custom_call.1} parent=1 // pred_check_branch
      %41 = sbr.rel (0) target = $region13
    $region12: #{tpu_custom_call.1} parent=1 // pred_region
      _
    $region13: #{tpu_custom_call.1} parent=1 // pred_fallthru
      _
    // Predicated region
    $region14: #{tpu_custom_call.1} parent=1 // pred_check
      _
    $region15: #{tpu_custom_call.1} parent=1 // pred_check_branch
      %43 = sbr.rel (0) target = $region17
    $region16: #{tpu_custom_call.1} parent=1 // pred_region
      %s45 = ssub.s32 1024, 1024
      %46 = vsyncadd [#allocation6], %s45
      %s47 = sshll.u32 [#allocation7], 4
      %s48 = int_to_ptr.vmem [resolvable:$true] %s47
      %53 = dma.hbm_to_vmem [thread:$0]  %s3, 1024, %s48, [#allocation6], 64, 64, 4
    $region17: #{tpu_custom_call.1} parent=1 // pred_fallthru
      _
    // Predicated region
    $region18: #{tpu_custom_call.1} parent=1 // pred_check
      _
    $region19: #{tpu_custom_call.1} parent=1 // pred_check_branch
      %55 = sbr.rel (0) target = $region21
    $region20: #{tpu_custom_call.1} parent=1 // pred_region
      _
    $region21: #{tpu_custom_call.1} parent=1 // pred_fallthru
      _
    // Predicated region
    $region22: #{tpu_custom_call.1} parent=1 // pred_check
      _
    $region23: #{tpu_custom_call.1} parent=1 // pred_check_branch
      %57 = sbr.rel (0) target = $region25
    $region24: #{tpu_custom_call.1} parent=1 // pred_region
      %s59 = ssub.s32 1024, 1024
      %60 = vsyncadd [#allocation9], %s59
      %s61 = sshll.u32 [#allocation8], 4
      %s62 = int_to_ptr.vmem [resolvable:$true] %s61
      %67 = dma.hbm_to_vmem [thread:$0]  %s5, 1024, %s62, [#allocation9], 64, 64, 4
    $region25: #{tpu_custom_call.1} parent=1 // pred_fallthru
      _
    // Predicated region
    $region26: #{tpu_custom_call.1} parent=1 // pred_check
      _
    $region27: #{tpu_custom_call.1} parent=1 // pred_check_branch
      %69 = sbr.rel (0) target = $region29
    $region28: #{tpu_custom_call.1} parent=1 // pred_region
      _
    $region29: #{tpu_custom_call.1} parent=1 // pred_fallthru
      _
    // Predicated region
    $region30: #{tpu_custom_call.1} parent=1 // pred_check
      _
    $region31: #{tpu_custom_call.1} parent=1 // pred_check_branch
      %71 = sbr.rel (0) target = $region33
    $region32: #{tpu_custom_call.1} parent=1 // pred_region
      %72 = dma.done [#allocation3], 128
    $region33: #{tpu_custom_call.1} parent=1 // pred_fallthru
      _
    // Predicated region
    $region34: #{tpu_custom_call.1} parent=1 // pred_check
      _
    $region35: #{tpu_custom_call.1} parent=1 // pred_check_branch
      %74 = sbr.rel (0) target = $region37
    $region36: #{tpu_custom_call.1} parent=1 // pred_region
      %75 = dma.done [#allocation6], 1024
    $region37: #{tpu_custom_call.1} parent=1 // pred_fallthru
      _
    // Predicated region
    $region38: #{tpu_custom_call.1} parent=1 // pred_check
      _
    $region39: #{tpu_custom_call.1} parent=1 // pred_check_branch
      %77 = sbr.rel (0) target = $region41
    $region40: #{tpu_custom_call.1} parent=1 // pred_region
      %78 = dma.done [#allocation6], 1024
    $region41: #{tpu_custom_call.1} parent=1 // pred_fallthru
      _
    // Predicated region
    $region42: #{tpu_custom_call.1} parent=1 // pred_check
      _
    $region43: #{tpu_custom_call.1} parent=1 // pred_check_branch
      %80 = sbr.rel (0) target = $region45
    $region44: #{tpu_custom_call.1} parent=1 // pred_region
      %81 = dma.done [#allocation9], 1024
    $region45: #{tpu_custom_call.1} parent=1 // pred_fallthru
      _
    %v83 = vld [vmem:[#allocation2] sm:$0xf]
    %v84 = vld [vmem:[#allocation2 + $0x4] sm:$0xf]
    %v85 = vld [vmem:[#allocation5] sm:$0xf]
    %v86 = vld [vmem:[#allocation5 + $0x4] sm:$0xf]
    %v87 = vld [vmem:[#allocation5 + $0x8] sm:$0xf]
    %v88 = vld [vmem:[#allocation5 + $0xc] sm:$0xf]
    %v89 = vld [vmem:[#allocation5 + $0x10] sm:$0xf]
    %v90 = vld [vmem:[#allocation5 + $0x14] sm:$0xf]
    %v91 = vld [vmem:[#allocation5 + $0x18] sm:$0xf]
    %v92 = vld [vmem:[#allocation5 + $0x1c] sm:$0xf]
    %v93 = vld [vmem:[#allocation5 + $0x20] sm:$0xf]
    %v94 = vld [vmem:[#allocation5 + $0x24] sm:$0xf]
    %v95 = vld [vmem:[#allocation5 + $0x28] sm:$0xf]
    %v96 = vld [vmem:[#allocation5 + $0x2c] sm:$0xf]
    %v97 = vld [vmem:[#allocation5 + $0x30] sm:$0xf]
    %v98 = vld [vmem:[#allocation5 + $0x34] sm:$0xf]
    %v99 = vld [vmem:[#allocation5 + $0x38] sm:$0xf]
    %v100 = vld [vmem:[#allocation5 + $0x3c] sm:$0xf]
    %v101 = vld [vmem:[%s2] sm:$0x1]
    %v103 = vlaneseq
    %v104 = vshrl.u32 %v103, 7
    %v105 = vsub.s32 0, %v104
    %v106 = vrot.slane %v101, %v105
    %v110 = vunpack.c.l.b16 %v83
    %v111 = vunpack.c.l.b16 %v84
    %v112 = vpack.c.b16 %v111, %v110
    %v130 = vunpack.c.l.b16 %v85
    %v131 = vunpack.c.l.b16 %v86
    %v132 = vunpack.c.l.b16 %v87
    %v133 = vunpack.c.l.b16 %v88
    %v134 = vunpack.c.l.b16 %v89
    %v135 = vunpack.c.l.b16 %v90
    %v136 = vunpack.c.l.b16 %v91
    %v137 = vunpack.c.l.b16 %v92
    %v138 = vunpack.c.l.b16 %v93
    %v139 = vunpack.c.l.b16 %v94
    %v140 = vunpack.c.l.b16 %v95
    %v141 = vunpack.c.l.b16 %v96
    %v142 = vunpack.c.l.b16 %v97
    %v143 = vunpack.c.l.b16 %v98
    %v144 = vunpack.c.l.b16 %v99
    %v145 = vunpack.c.l.b16 %v100
    %v146 = vpack.c.b16 %v131, %v130
    %v147 = vpack.c.b16 %v133, %v132
    %v148 = vpack.c.b16 %v135, %v134
    %v149 = vpack.c.b16 %v137, %v136
    %v150 = vpack.c.b16 %v139, %v138
    %v151 = vpack.c.b16 %v141, %v140
    %v152 = vpack.c.b16 %v143, %v142
    %v153 = vpack.c.b16 %v145, %v144
    %162 = vmatprep.subr.bf16.mxu0 0
    %163 = vmatpush1.bf16.msra.mxu0 %v153
    %164 = vmatprep.subr.bf16.mxu0 0
    %165 = vmatpush1.bf16.msra.mxu0 %v152
    %166 = vmatprep.subr.bf16.mxu0 0
    %167 = vmatpush1.bf16.msra.mxu0 %v151
    %168 = vmatprep.subr.bf16.mxu0 0
    %169 = vmatpush1.bf16.msra.mxu0 %v150
    %170 = vmatprep.subr.bf16.mxu0 0
    %171 = vmatpush1.bf16.msra.mxu0 %v149
    %172 = vmatprep.subr.bf16.mxu0 0
    %173 = vmatpush1.bf16.msra.mxu0 %v148
    %174 = vmatprep.subr.bf16.mxu0 0
    %175 = vmatpush1.bf16.msra.mxu0 %v147
    %176 = vmatprep.subr.bf16.mxu0 0
    %177 = vmatpush1.bf16.msra.mxu0 %v146
    %178 = vmatprep.subr.bf16.mxu0 0
    %179 = vmatpush2.bf16.msra.mxu0 0
    %180 = vmatprep.subr.bf16.mxu0 0
    %181 = vmatpush2.bf16.msra.mxu0 0
    %182 = vmatprep.subr.bf16.mxu0 0
    %183 = vmatpush2.bf16.msra.mxu0 0
    %184 = vmatprep.subr.bf16.mxu0 0
    %185 = vmatpush2.bf16.msra.mxu0 0
    %186 = vmatprep.subr.bf16.mxu0 0
    %187 = vmatpush2.bf16.msra.mxu0 0
    %188 = vmatprep.subr.bf16.mxu0 0
    %189 = vmatpush2.bf16.msra.mxu0 0
    %190 = vmatprep.subr.bf16.mxu0 0
    %191 = vmatpush2.bf16.msra.mxu0 0
    %192 = vmatprep.subr.bf16.mxu0 0
    %193 = vmatpush2.bf16.msra.mxu0 0
    %194 = vmatprep.mubr.bf16.mxu0 0
    %195 = vmatmul.mubr.bf16.gmra.mxu0 %v112
    %v196 = vpop.f32.mrf.mxu0
    %v197 = vadd.f32 %v106, %v196
    %v198 = vpop.f32.mrf.mxu0
    %v199 = vpop.f32.mrf.mxu0
    %v200 = vadd.f32 %v106, %v199
    %v201 = vpop.f32.mrf.mxu0
    %202 = vdwg.mxu0
    %v203 = vmul.f32 %v197, 0.01
    %v204 = vmul.f32 %v200, 0.01
    %v205 = vmax.f32 %v197, %v203
    %v206 = vmax.f32 %v200, %v204
    %v207 = vpack.c.bf16 %v206, %v205
    %v208 = vld [vmem:[#allocation7] sm:$0xf]
    %v209 = vld [vmem:[#allocation7 + $0x4] sm:$0xf]
    %v210 = vld [vmem:[#allocation7 + $0x8] sm:$0xf]
    %v211 = vld [vmem:[#allocation7 + $0xc] sm:$0xf]
    %v212 = vld [vmem:[#allocation7 + $0x10] sm:$0xf]
    %v213 = vld [vmem:[#allocation7 + $0x14] sm:$0xf]
    %v214 = vld [vmem:[#allocation7 + $0x18] sm:$0xf]
    %v215 = vld [vmem:[#allocation7 + $0x1c] sm:$0xf]
    %v216 = vld [vmem:[#allocation7 + $0x20] sm:$0xf]
    %v217 = vld [vmem:[#allocation7 + $0x24] sm:$0xf]
    %v218 = vld [vmem:[#allocation7 + $0x28] sm:$0xf]
    %v219 = vld [vmem:[#allocation7 + $0x2c] sm:$0xf]
    %v220 = vld [vmem:[#allocation7 + $0x30] sm:$0xf]
    %v221 = vld [vmem:[#allocation7 + $0x34] sm:$0xf]
    %v222 = vld [vmem:[#allocation7 + $0x38] sm:$0xf]
    %v223 = vld [vmem:[#allocation7 + $0x3c] sm:$0xf]
    %v224 = vld [vmem:[%s4] sm:$0x1]
    %v226 = vlaneseq
    %v227 = vshrl.u32 %v226, 7
    %v228 = vsub.s32 0, %v227
    %v229 = vrot.slane %v224, %v228
    %v247 = vunpack.c.l.b16 %v208
    %v248 = vunpack.c.l.b16 %v209
    %v249 = vunpack.c.l.b16 %v210
    %v250 = vunpack.c.l.b16 %v211
    %v251 = vunpack.c.l.b16 %v212
    %v252 = vunpack.c.l.b16 %v213
    %v253 = vunpack.c.l.b16 %v214
    %v254 = vunpack.c.l.b16 %v215
    %v255 = vunpack.c.l.b16 %v216
    %v256 = vunpack.c.l.b16 %v217
    %v257 = vunpack.c.l.b16 %v218
    %v258 = vunpack.c.l.b16 %v219
    %v259 = vunpack.c.l.b16 %v220
    %v260 = vunpack.c.l.b16 %v221
    %v261 = vunpack.c.l.b16 %v222
    %v262 = vunpack.c.l.b16 %v223
    %v263 = vpack.c.b16 %v248, %v247
    %v264 = vpack.c.b16 %v250, %v249
    %v265 = vpack.c.b16 %v252, %v251
    %v266 = vpack.c.b16 %v254, %v253
    %v267 = vpack.c.b16 %v256, %v255
    %v268 = vpack.c.b16 %v258, %v257
    %v269 = vpack.c.b16 %v260, %v259
    %v270 = vpack.c.b16 %v262, %v261
    %279 = vmatprep.subr.bf16.mxu0 0
    %280 = vmatpush1.bf16.msra.mxu0 %v270
    %281 = vmatprep.subr.bf16.mxu0 0
    %282 = vmatpush1.bf16.msra.mxu0 %v269
    %283 = vmatprep.subr.bf16.mxu0 0
    %284 = vmatpush1.bf16.msra.mxu0 %v268
    %285 = vmatprep.subr.bf16.mxu0 0
    %286 = vmatpush1.bf16.msra.mxu0 %v267
    %287 = vmatprep.subr.bf16.mxu0 0
    %288 = vmatpush1.bf16.msra.mxu0 %v266
    %289 = vmatprep.subr.bf16.mxu0 0
    %290 = vmatpush1.bf16.msra.mxu0 %v265
    %291 = vmatprep.subr.bf16.mxu0 0
    %292 = vmatpush1.bf16.msra.mxu0 %v264
    %293 = vmatprep.subr.bf16.mxu0 0
    %294 = vmatpush1.bf16.msra.mxu0 %v263
    %295 = vmatprep.subr.bf16.mxu0 0
    %296 = vmatpush2.bf16.msra.mxu0 0
    %297 = vmatprep.subr.bf16.mxu0 0
    %298 = vmatpush2.bf16.msra.mxu0 0
    %299 = vmatprep.subr.bf16.mxu0 0
    %300 = vmatpush2.bf16.msra.mxu0 0
    %301 = vmatprep.subr.bf16.mxu0 0
    %302 = vmatpush2.bf16.msra.mxu0 0
    %303 = vmatprep.subr.bf16.mxu0 0
    %304 = vmatpush2.bf16.msra.mxu0 0
    %305 = vmatprep.subr.bf16.mxu0 0
    %306 = vmatpush2.bf16.msra.mxu0 0
    %307 = vmatprep.subr.bf16.mxu0 0
    %308 = vmatpush2.bf16.msra.mxu0 0
    %309 = vmatprep.subr.bf16.mxu0 0
    %310 = vmatpush2.bf16.msra.mxu0 0
    %311 = vmatprep.mubr.bf16.mxu0 0
    %312 = vmatmul.mubr.bf16.gmra.mxu0 %v207
    %v313 = vpop.f32.mrf.mxu0
    %v314 = vadd.f32 %v229, %v313
    %v315 = vpop.f32.mrf.mxu0
    %v316 = vpop.f32.mrf.mxu0
    %v317 = vadd.f32 %v229, %v316
    %v318 = vpop.f32.mrf.mxu0
    %319 = vdwg.mxu0
    %v320 = vmul.f32 %v314, 0.01
    %v321 = vmul.f32 %v317, 0.01
    %v322 = vmax.f32 %v314, %v320
    %v323 = vmax.f32 %v317, %v321
    %v324 = vpack.c.bf16 %v323, %v322
    %v325 = vld [vmem:[#allocation8] sm:$0xf]
    %v326 = vld [vmem:[#allocation8 + $0x4] sm:$0xf]
    %v327 = vld [vmem:[#allocation8 + $0x8] sm:$0xf]
    %v328 = vld [vmem:[#allocation8 + $0xc] sm:$0xf]
    %v329 = vld [vmem:[#allocation8 + $0x10] sm:$0xf]
    %v330 = vld [vmem:[#allocation8 + $0x14] sm:$0xf]
    %v331 = vld [vmem:[#allocation8 + $0x18] sm:$0xf]
    %v332 = vld [vmem:[#allocation8 + $0x1c] sm:$0xf]
    %v333 = vld [vmem:[#allocation8 + $0x20] sm:$0xf]
    %v334 = vld [vmem:[#allocation8 + $0x24] sm:$0xf]
    %v335 = vld [vmem:[#allocation8 + $0x28] sm:$0xf]
    %v336 = vld [vmem:[#allocation8 + $0x2c] sm:$0xf]
    %v337 = vld [vmem:[#allocation8 + $0x30] sm:$0xf]
    %v338 = vld [vmem:[#allocation8 + $0x34] sm:$0xf]
    %v339 = vld [vmem:[#allocation8 + $0x38] sm:$0xf]
    %v340 = vld [vmem:[#allocation8 + $0x3c] sm:$0xf]
    %v341 = vld [vmem:[%s6] sm:$0x1]
    %v343 = vlaneseq
    %v344 = vshrl.u32 %v343, 7
    %v345 = vsub.s32 0, %v344
    %v346 = vrot.slane %v341, %v345
    %v364 = vunpack.c.l.b16 %v325
    %v365 = vunpack.c.l.b16 %v326
    %v366 = vunpack.c.l.b16 %v327
    %v367 = vunpack.c.l.b16 %v328
    %v368 = vunpack.c.l.b16 %v329
    %v369 = vunpack.c.l.b16 %v330
    %v370 = vunpack.c.l.b16 %v331
    %v371 = vunpack.c.l.b16 %v332
    %v372 = vunpack.c.l.b16 %v333
    %v373 = vunpack.c.l.b16 %v334
    %v374 = vunpack.c.l.b16 %v335
    %v375 = vunpack.c.l.b16 %v336
    %v376 = vunpack.c.l.b16 %v337
    %v377 = vunpack.c.l.b16 %v338
    %v378 = vunpack.c.l.b16 %v339
    %v379 = vunpack.c.l.b16 %v340
    %v380 = vpack.c.b16 %v365, %v364
    %v381 = vpack.c.b16 %v367, %v366
    %v382 = vpack.c.b16 %v369, %v368
    %v383 = vpack.c.b16 %v371, %v370
    %v384 = vpack.c.b16 %v373, %v372
    %v385 = vpack.c.b16 %v375, %v374
    %v386 = vpack.c.b16 %v377, %v376
    %v387 = vpack.c.b16 %v379, %v378
    %396 = vmatprep.subr.bf16.mxu0 0
    %397 = vmatpush1.bf16.msra.mxu0 %v387
    %398 = vmatprep.subr.bf16.mxu0 0
    %399 = vmatpush1.bf16.msra.mxu0 %v386
    %400 = vmatprep.subr.bf16.mxu0 0
    %401 = vmatpush1.bf16.msra.mxu0 %v385
    %402 = vmatprep.subr.bf16.mxu0 0
    %403 = vmatpush1.bf16.msra.mxu0 %v384
    %404 = vmatprep.subr.bf16.mxu0 0
    %405 = vmatpush1.bf16.msra.mxu0 %v383
    %406 = vmatprep.subr.bf16.mxu0 0
    %407 = vmatpush1.bf16.msra.mxu0 %v382
    %408 = vmatprep.subr.bf16.mxu0 0
    %409 = vmatpush1.bf16.msra.mxu0 %v381
    %410 = vmatprep.subr.bf16.mxu0 0
    %411 = vmatpush1.bf16.msra.mxu0 %v380
    %412 = vmatprep.subr.bf16.mxu0 0
    %413 = vmatpush2.bf16.msra.mxu0 0
    %414 = vmatprep.subr.bf16.mxu0 0
    %415 = vmatpush2.bf16.msra.mxu0 0
    %416 = vmatprep.subr.bf16.mxu0 0
    %417 = vmatpush2.bf16.msra.mxu0 0
    %418 = vmatprep.subr.bf16.mxu0 0
    %419 = vmatpush2.bf16.msra.mxu0 0
    %420 = vmatprep.subr.bf16.mxu0 0
    %421 = vmatpush2.bf16.msra.mxu0 0
    %422 = vmatprep.subr.bf16.mxu0 0
    %423 = vmatpush2.bf16.msra.mxu0 0
    %424 = vmatprep.subr.bf16.mxu0 0
    %425 = vmatpush2.bf16.msra.mxu0 0
    %426 = vmatprep.subr.bf16.mxu0 0
    %427 = vmatpush2.bf16.msra.mxu0 0
    %428 = vmatprep.mubr.bf16.mxu0 0
    %429 = vmatmul.mubr.bf16.gmra.mxu0 %v324
    %v430 = vpop.f32.mrf.mxu0
    %v431 = vadd.f32 %v346, %v430
    %v432 = vpop.f32.mrf.mxu0
    %v433 = vpop.f32.mrf.mxu0
    %v434 = vadd.f32 %v346, %v433
    %v435 = vpop.f32.mrf.mxu0
    %436 = vdwg.mxu0
    %437 = vst [vmem:[#allocation10] sm:$0xff] %v431
    %438 = vst [vmem:[#allocation10 + $0x8] sm:$0xff] %v434
    // Predicated region
    $region46: #{tpu_custom_call.1} parent=1 // pred_check
      _
    $region47: #{tpu_custom_call.1} parent=1 // pred_check_branch
      %440 = sbr.rel (0) target = $region49
    $region48: #{tpu_custom_call.1} parent=1 // pred_region
      %s442 = ssub.s32 256, 256
      %443 = vsyncadd [#allocation4], %s442
      %s444 = sshll.u32 [#allocation10], 4
      %s445 = int_to_ptr.vmem [resolvable:$true] %s444
      %450 = dma.vmem_to_hbm [thread:$0]  %s445, 256, %s7, [#allocation4], 128, 128, 8
    $region49: #{tpu_custom_call.1} parent=1 // pred_fallthru
      _
    // Predicated region
    $region50: #{tpu_custom_call.1} parent=1 // pred_check
      _
    $region51: #{tpu_custom_call.1} parent=1 // pred_check_branch
      %452 = sbr.rel (0) target = $region53
    $region52: #{tpu_custom_call.1} parent=1 // pred_region
      %453 = dma.done [#allocation4], 256
    $region53: #{tpu_custom_call.1} parent=1 // pred_fallthru
      _
    %454 = vsyncpa [#allocation3], 1
    %455 = vsyncpa [#allocation6], 1
    %456 = vsyncpa [#allocation9], 1
    %457 = vsyncpa [#allocation4], 1

// kernel: tpu_custom_call.1
$region0: #{tpu_custom_call.1}
  #allocation0 [shape = 'u32[]', space=smem, size = 0x4, offset = 0x4, fixed_abs, tag = 'smem constant byte address 0x4 - core index']
  #allocation1 [shape = 'u32[144,128]{1,0:T(1,128)}', space=vmem, size = 0x12000, scoped, tag = 'internal scratch']
  %s0 = inlined_call_operand.hbm [shape: bf16[16,128], index: 0, kind: input, shape index: {}]
  %s1 = inlined_call_operand.hbm [shape: bf16[128,128], index: 1, kind: input, shape index: {}]
  %s2 = inlined_call_operand.vmem [shape: f32[1,128], index: 2, kind: input, shape index: {}]
  %s3 = inlined_call_operand.hbm [shape: bf16[128,128], index: 3, kind: input, shape index: {}]
  %s4 = inlined_call_operand.vmem [shape: f32[1,128], index: 4, kind: input, shape index: {}]
  %s5 = inlined_call_operand.hbm [shape: bf16[128,128], index: 5, kind: input, shape index: {}]
  %s6 = inlined_call_operand.vmem [shape: f32[1,128], index: 6, kind: input, shape index: {}]
  %s7 = inlined_call_operand.hbm [shape: f32[16,128], index: 7, kind: output, shape index: {}]
  %s8 = sld [smem:[#allocation0]]
  $region54: #{tpu_custom_call.1} parent=0
    _
  %s10 = ssub.s32 1, %s8
  %s11 = scalar_select 0, %s10, %s8
  $region1: #{tpu_custom_call.1} parent=0
    #allocation2 [shape = 'u8[4096]{0}', space=vmem, size = 0x1000, scoped, tag = 'input window, operand 0, single buffered']
    #allocation3 [shape = 's32[1]{0}', space=sflag, size = 0x4, scoped, tag = 'scoped memory for tpu_custom_call.1']
    #allocation4 [shape = 's32[1]{0}', space=sflag, size = 0x4, scoped, tag = 'scoped memory for tpu_custom_call.1']
    #allocation5 [shape = 'u8[32768]{0}', space=vmem, size = 0x8000, scoped, tag = 'input window, operand 1, single buffered']
    #allocation6 [shape = 's32[1]{0}', space=sflag, size = 0x4, scoped, tag = 'scoped memory for tpu_custom_call.1']
    #allocation7 [shape = 'u8[32768]{0}', space=vmem, size = 0x8000, scoped, tag = 'input window, operand 3, single buffered']
    #allocation8 [shape = 'u8[32768]{0}', space=vmem, size = 0x8000, scoped, tag = 'input window, operand 5, single buffered']
    #allocation9 [shape = 's32[1]{0}', space=sflag, size = 0x4, scoped, tag = 'scoped memory for tpu_custom_call.1']
    #allocation10 [shape = 'u8[8192]{0}', space=vmem, size = 0x2000, scoped, tag = 'output window, operand 0, single buffered']
    %12 = vsyncpa [#allocation3], 0
    %13 = vsyncpa [#allocation6], 0
    %14 = vsyncpa [#allocation9], 0
    %15 = vsyncpa [#allocation4], 0
    // Predicated region
    $region2: #{tpu_custom_call.1} parent=1 // pred_check
      _
    $region3: #{tpu_custom_call.1} parent=1 // pred_check_branch
      %17 = sbr.rel (0) target = $region5
    $region4: #{tpu_custom_call.1} parent=1 // pred_region
      %s19 = ssub.s32 128, 128
      %20 = vsyncadd [#allocation3], %s19
      %s21 = sshll.u32 [#allocation2], 4
      %s22 = int_to_ptr.vmem [resolvable:$true] %s21
      %27 = dma.hbm_to_vmem [thread:$0]  %s0, 128, %s22, [#allocation3], 64, 64, 4
    $region5: #{tpu_custom_call.1} parent=1 // pred_fallthru
      _
    // Predicated region
    $region6: #{tpu_custom_call.1} parent=1 // pred_check
      _
    $region7: #{tpu_custom_call.1} parent=1 // pred_check_branch
      %29 = sbr.rel (0) target = $region9
    $region8: #{tpu_custom_call.1} parent=1 // pred_region
      %s31 = ssub.s32 1024, 1024
      %32 = vsyncadd [#allocation6], %s31
      %s33 = sshll.u32 [#allocation5], 4
      %s34 = int_to_ptr.vmem [resolvable:$true] %s33
      %39 = dma.hbm_to_vmem [thread:$0]  %s1, 1024, %s34, [#allocation6], 64, 64, 4
    $region9: #{tpu_custom_call.1} parent=1 // pred_fallthru
      _
    // Predicated region
    $region10: #{tpu_custom_call.1} parent=1 // pred_check
      _
    $region11: #{tpu_custom_call.1} parent=1 // pred_check_branch
      %41 = sbr.rel (0) target = $region13
    $region12: #{tpu_custom_call.1} parent=1 // pred_region
      _
    $region13: #{tpu_custom_call.1} parent=1 // pred_fallthru
      _
    // Predicated region
    $region14: #{tpu_custom_call.1} parent=1 // pred_check
      _
    $region15: #{tpu_custom_call.1} parent=1 // pred_check_branch
      %43 = sbr.rel (0) target = $region17
    $region16: #{tpu_custom_call.1} parent=1 // pred_region
      %s45 = ssub.s32 1024, 1024
      %46 = vsyncadd [#allocation6], %s45
      %s47 = sshll.u32 [#allocation7], 4
      %s48 = int_to_ptr.vmem [resolvable:$true] %s47
      %53 = dma.hbm_to_vmem [thread:$0]  %s3, 1024, %s48, [#allocation6], 64, 64, 4
    $region17: #{tpu_custom_call.1} parent=1 // pred_fallthru
      _
    // Predicated region
    $region18: #{tpu_custom_call.1} parent=1 // pred_check
      _
    $region19: #{tpu_custom_call.1} parent=1 // pred_check_branch
      %55 = sbr.rel (0) target = $region21
    $region20: #{tpu_custom_call.1} parent=1 // pred_region
      _
    $region21: #{tpu_custom_call.1} parent=1 // pred_fallthru
      _
    // Predicated region
    $region22: #{tpu_custom_call.1} parent=1 // pred_check
      _
    $region23: #{tpu_custom_call.1} parent=1 // pred_check_branch
      %57 = sbr.rel (0) target = $region25
    $region24: #{tpu_custom_call.1} parent=1 // pred_region
      %s59 = ssub.s32 1024, 1024
      %60 = vsyncadd [#allocation9], %s59
      %s61 = sshll.u32 [#allocation8], 4
      %s62 = int_to_ptr.vmem [resolvable:$true] %s61
      %67 = dma.hbm_to_vmem [thread:$0]  %s5, 1024, %s62, [#allocation9], 64, 64, 4
    $region25: #{tpu_custom_call.1} parent=1 // pred_fallthru
      _
    // Predicated region
    $region26: #{tpu_custom_call.1} parent=1 // pred_check
      _
    $region27: #{tpu_custom_call.1} parent=1 // pred_check_branch
      %69 = sbr.rel (0) target = $region29
    $region28: #{tpu_custom_call.1} parent=1 // pred_region
      _
    $region29: #{tpu_custom_call.1} parent=1 // pred_fallthru
      _
    // Predicated region
    $region30: #{tpu_custom_call.1} parent=1 // pred_check
      _
    $region31: #{tpu_custom_call.1} parent=1 // pred_check_branch
      %71 = sbr.rel (0) target = $region33
    $region32: #{tpu_custom_call.1} parent=1 // pred_region
      %72 = dma.done [#allocation3], 128
    $region33: #{tpu_custom_call.1} parent=1 // pred_fallthru
      _
    // Predicated region
    $region34: #{tpu_custom_call.1} parent=1 // pred_check
      _
    $region35: #{tpu_custom_call.1} parent=1 // pred_check_branch
      %74 = sbr.rel (0) target = $region37
    $region36: #{tpu_custom_call.1} parent=1 // pred_region
      %75 = dma.done [#allocation6], 1024
    $region37: #{tpu_custom_call.1} parent=1 // pred_fallthru
      _
    // Predicated region
    $region38: #{tpu_custom_call.1} parent=1 // pred_check
      _
    $region39: #{tpu_custom_call.1} parent=1 // pred_check_branch
      %77 = sbr.rel (0) target = $region41
    $region40: #{tpu_custom_call.1} parent=1 // pred_region
      %78 = dma.done [#allocation6], 1024
    $region41: #{tpu_custom_call.1} parent=1 // pred_fallthru
      _
    // Predicated region
    $region42: #{tpu_custom_call.1} parent=1 // pred_check
      _
    $region43: #{tpu_custom_call.1} parent=1 // pred_check_branch
      %80 = sbr.rel (0) target = $region45
    $region44: #{tpu_custom_call.1} parent=1 // pred_region
      %81 = dma.done [#allocation9], 1024
    $region45: #{tpu_custom_call.1} parent=1 // pred_fallthru
      _
    %v83 = vld [vmem:[#allocation2] sm:$0xf]
    %v84 = vld [vmem:[#allocation2 + $0x4] sm:$0xf]
    %v85 = vld [vmem:[#allocation5] sm:$0xf]
    %v86 = vld [vmem:[#allocation5 + $0x4] sm:$0xf]
    %v87 = vld [vmem:[#allocation5 + $0x8] sm:$0xf]
    %v88 = vld [vmem:[#allocation5 + $0xc] sm:$0xf]
    %v89 = vld [vmem:[#allocation5 + $0x10] sm:$0xf]
    %v90 = vld [vmem:[#allocation5 + $0x14] sm:$0xf]
    %v91 = vld [vmem:[#allocation5 + $0x18] sm:$0xf]
    %v92 = vld [vmem:[#allocation5 + $0x1c] sm:$0xf]
    %v93 = vld [vmem:[#allocation5 + $0x20] sm:$0xf]
    %v94 = vld [vmem:[#allocation5 + $0x24] sm:$0xf]
    %v95 = vld [vmem:[#allocation5 + $0x28] sm:$0xf]
    %v96 = vld [vmem:[#allocation5 + $0x2c] sm:$0xf]
    %v97 = vld [vmem:[#allocation5 + $0x30] sm:$0xf]
    %v98 = vld [vmem:[#allocation5 + $0x34] sm:$0xf]
    %v99 = vld [vmem:[#allocation5 + $0x38] sm:$0xf]
    %v100 = vld [vmem:[#allocation5 + $0x3c] sm:$0xf]
    %v101 = vld [vmem:[%s2] sm:$0x1]
    %v103 = vlaneseq
    %v104 = vshrl.u32 %v103, 7
    %v105 = vsub.s32 0, %v104
    %v106 = vrot.slane %v101, %v105
    %v110 = vunpack.c.l.b16 %v83
    %v111 = vunpack.c.l.b16 %v84
    %v112 = vpack.c.b16 %v111, %v110
    %v130 = vunpack.c.l.b16 %v85
    %v131 = vunpack.c.l.b16 %v86
    %v132 = vunpack.c.l.b16 %v87
    %v133 = vunpack.c.l.b16 %v88
    %v134 = vunpack.c.l.b16 %v89
    %v135 = vunpack.c.l.b16 %v90
    %v136 = vunpack.c.l.b16 %v91
    %v137 = vunpack.c.l.b16 %v92
    %v138 = vunpack.c.l.b16 %v93
    %v139 = vunpack.c.l.b16 %v94
    %v140 = vunpack.c.l.b16 %v95
    %v141 = vunpack.c.l.b16 %v96
    %v142 = vunpack.c.l.b16 %v97
    %v143 = vunpack.c.l.b16 %v98
    %v144 = vunpack.c.l.b16 %v99
    %v145 = vunpack.c.l.b16 %v100
    %v146 = vpack.c.b16 %v131, %v130
    %v147 = vpack.c.b16 %v133, %v132
    %v148 = vpack.c.b16 %v135, %v134
    %v149 = vpack.c.b16 %v137, %v136
    %v150 = vpack.c.b16 %v139, %v138
    %v151 = vpack.c.b16 %v141, %v140
    %v152 = vpack.c.b16 %v143, %v142
    %v153 = vpack.c.b16 %v145, %v144
    %162 = vmatprep.subr.bf16.mxu0 0
    %163 = vmatpush1.bf16.msra.mxu0 %v153
    %164 = vmatprep.subr.bf16.mxu0 0
    %165 = vmatpush1.bf16.msra.mxu0 %v152
    %166 = vmatprep.subr.bf16.mxu0 0
    %167 = vmatpush1.bf16.msra.mxu0 %v151
    %168 = vmatprep.subr.bf16.mxu0 0
    %169 = vmatpush1.bf16.msra.mxu0 %v150
    %170 = vmatprep.subr.bf16.mxu0 0
    %171 = vmatpush1.bf16.msra.mxu0 %v149
    %172 = vmatprep.subr.bf16.mxu0 0
    %173 = vmatpush1.bf16.msra.mxu0 %v148
    %174 = vmatprep.subr.bf16.mxu0 0
    %175 = vmatpush1.bf16.msra.mxu0 %v147
    %176 = vmatprep.subr.bf16.mxu0 0
    %177 = vmatpush1.bf16.msra.mxu0 %v146
    %178 = vmatprep.subr.bf16.mxu0 0
    %179 = vmatpush2.bf16.msra.mxu0 0
    %180 = vmatprep.subr.bf16.mxu0 0
    %181 = vmatpush2.bf16.msra.mxu0 0
    %182 = vmatprep.subr.bf16.mxu0 0
    %183 = vmatpush2.bf16.msra.mxu0 0
    %184 = vmatprep.subr.bf16.mxu0 0
    %185 = vmatpush2.bf16.msra.mxu0 0
    %186 = vmatprep.subr.bf16.mxu0 0
    %187 = vmatpush2.bf16.msra.mxu0 0
    %188 = vmatprep.subr.bf16.mxu0 0
    %189 = vmatpush2.bf16.msra.mxu0 0
    %190 = vmatprep.subr.bf16.mxu0 0
    %191 = vmatpush2.bf16.msra.mxu0 0
    %192 = vmatprep.subr.bf16.mxu0 0
    %193 = vmatpush2.bf16.msra.mxu0 0
    %194 = vmatprep.mubr.bf16.mxu0 0
    %195 = vmatmul.mubr.bf16.gmra.mxu0 %v112
    %v196 = vpop.f32.mrf.mxu0
    %v197 = vadd.f32 %v106, %v196
    %v198 = vpop.f32.mrf.mxu0
    %v199 = vpop.f32.mrf.mxu0
    %v200 = vadd.f32 %v106, %v199
    %v201 = vpop.f32.mrf.mxu0
    %202 = vdwg.mxu0
    %v203 = vmul.f32 %v197, 0.01
    %v204 = vmul.f32 %v200, 0.01
    %v205 = vmax.f32 %v197, %v203
    %v206 = vmax.f32 %v200, %v204
    %v207 = vpack.c.bf16 %v206, %v205
    %v208 = vld [vmem:[#allocation7] sm:$0xf]
    %v209 = vld [vmem:[#allocation7 + $0x4] sm:$0xf]
    %v210 = vld [vmem:[#allocation7 + $0x8] sm:$0xf]
    %v211 = vld [vmem:[#allocation7 + $0xc] sm:$0xf]
    %v212 = vld [vmem:[#allocation7 + $0x10] sm:$0xf]
    %v213 = vld [vmem:[#allocation7 + $0x14] sm:$0xf]
    %v214 = vld [vmem:[#allocation7 + $0x18] sm:$0xf]
    %v215 = vld [vmem:[#allocation7 + $0x1c] sm:$0xf]
    %v216 = vld [vmem:[#allocation7 + $0x20] sm:$0xf]
    %v217 = vld [vmem:[#allocation7 + $0x24] sm:$0xf]
    %v218 = vld [vmem:[#allocation7 + $0x28] sm:$0xf]
    %v219 = vld [vmem:[#allocation7 + $0x2c] sm:$0xf]
    %v220 = vld [vmem:[#allocation7 + $0x30] sm:$0xf]
    %v221 = vld [vmem:[#allocation7 + $0x34] sm:$0xf]
    %v222 = vld [vmem:[#allocation7 + $0x38] sm:$0xf]
    %v223 = vld [vmem:[#allocation7 + $0x3c] sm:$0xf]
    %v224 = vld [vmem:[%s4] sm:$0x1]
    %v226 = vlaneseq
    %v227 = vshrl.u32 %v226, 7
    %v228 = vsub.s32 0, %v227
    %v229 = vrot.slane %v224, %v228
    %v247 = vunpack.c.l.b16 %v208
    %v248 = vunpack.c.l.b16 %v209
    %v249 = vunpack.c.l.b16 %v210
    %v250 = vunpack.c.l.b16 %v211
    %v251 = vunpack.c.l.b16 %v212
    %v252 = vunpack.c.l.b16 %v213
    %v253 = vunpack.c.l.b16 %v214
    %v254 = vunpack.c.l.b16 %v215
    %v255 = vunpack.c.l.b16 %v216
    %v256 = vunpack.c.l.b16 %v217
    %v257 = vunpack.c.l.b16 %v218
    %v258 = vunpack.c.l.b16 %v219
    %v259 = vunpack.c.l.b16 %v220
    %v260 = vunpack.c.l.b16 %v221
    %v261 = vunpack.c.l.b16 %v222
    %v262 = vunpack.c.l.b16 %v223
    %v263 = vpack.c.b16 %v248, %v247
    %v264 = vpack.c.b16 %v250, %v249
    %v265 = vpack.c.b16 %v252, %v251
    %v266 = vpack.c.b16 %v254, %v253
    %v267 = vpack.c.b16 %v256, %v255
    %v268 = vpack.c.b16 %v258, %v257
    %v269 = vpack.c.b16 %v260, %v259
    %v270 = vpack.c.b16 %v262, %v261
    %279 = vmatprep.subr.bf16.mxu0 0
    %280 = vmatpush1.bf16.msra.mxu0 %v270
    %281 = vmatprep.subr.bf16.mxu0 0
    %282 = vmatpush1.bf16.msra.mxu0 %v269
    %283 = vmatprep.subr.bf16.mxu0 0
    %284 = vmatpush1.bf16.msra.mxu0 %v268
    %285 = vmatprep.subr.bf16.mxu0 0
    %286 = vmatpush1.bf16.msra.mxu0 %v267
    %287 = vmatprep.subr.bf16.mxu0 0
    %288 = vmatpush1.bf16.msra.mxu0 %v266
    %289 = vmatprep.subr.bf16.mxu0 0
    %290 = vmatpush1.bf16.msra.mxu0 %v265
    %291 = vmatprep.subr.bf16.mxu0 0
    %292 = vmatpush1.bf16.msra.mxu0 %v264
    %293 = vmatprep.subr.bf16.mxu0 0
    %294 = vmatpush1.bf16.msra.mxu0 %v263
    %295 = vmatprep.subr.bf16.mxu0 0
    %296 = vmatpush2.bf16.msra.mxu0 0
    %297 = vmatprep.subr.bf16.mxu0 0
    %298 = vmatpush2.bf16.msra.mxu0 0
    %299 = vmatprep.subr.bf16.mxu0 0
    %300 = vmatpush2.bf16.msra.mxu0 0
    %301 = vmatprep.subr.bf16.mxu0 0
    %302 = vmatpush2.bf16.msra.mxu0 0
    %303 = vmatprep.subr.bf16.mxu0 0
    %304 = vmatpush2.bf16.msra.mxu0 0
    %305 = vmatprep.subr.bf16.mxu0 0
    %306 = vmatpush2.bf16.msra.mxu0 0
    %307 = vmatprep.subr.bf16.mxu0 0
    %308 = vmatpush2.bf16.msra.mxu0 0
    %309 = vmatprep.subr.bf16.mxu0 0
    %310 = vmatpush2.bf16.msra.mxu0 0
    %311 = vmatprep.mubr.bf16.mxu0 0
    %312 = vmatmul.mubr.bf16.gmra.mxu0 %v207
    %v313 = vpop.f32.mrf.mxu0
    %v314 = vadd.f32 %v229, %v313
    %v315 = vpop.f32.mrf.mxu0
    %v316 = vpop.f32.mrf.mxu0
    %v317 = vadd.f32 %v229, %v316
    %v318 = vpop.f32.mrf.mxu0
    %319 = vdwg.mxu0
    %v320 = vmul.f32 %v314, 0.01
    %v321 = vmul.f32 %v317, 0.01
    %v322 = vmax.f32 %v314, %v320
    %v323 = vmax.f32 %v317, %v321
    %v324 = vpack.c.bf16 %v323, %v322
    %v325 = vld [vmem:[#allocation8] sm:$0xf]
    %v326 = vld [vmem:[#allocation8 + $0x4] sm:$0xf]
    %v327 = vld [vmem:[#allocation8 + $0x8] sm:$0xf]
    %v328 = vld [vmem:[#allocation8 + $0xc] sm:$0xf]
    %v329 = vld [vmem:[#allocation8 + $0x10] sm:$0xf]
    %v330 = vld [vmem:[#allocation8 + $0x14] sm:$0xf]
    %v331 = vld [vmem:[#allocation8 + $0x18] sm:$0xf]
    %v332 = vld [vmem:[#allocation8 + $0x1c] sm:$0xf]
    %v333 = vld [vmem:[#allocation8 + $0x20] sm:$0xf]
    %v334 = vld [vmem:[#allocation8 + $0x24] sm:$0xf]
    %v335 = vld [vmem:[#allocation8 + $0x28] sm:$0xf]
    %v336 = vld [vmem:[#allocation8 + $0x2c] sm:$0xf]
    %v337 = vld [vmem:[#allocation8 + $0x30] sm:$0xf]
    %v338 = vld [vmem:[#allocation8 + $0x34] sm:$0xf]
    %v339 = vld [vmem:[#allocation8 + $0x38] sm:$0xf]
    %v340 = vld [vmem:[#allocation8 + $0x3c] sm:$0xf]
    %v341 = vld [vmem:[%s6] sm:$0x1]
    %v343 = vlaneseq
    %v344 = vshrl.u32 %v343, 7
    %v345 = vsub.s32 0, %v344
    %v346 = vrot.slane %v341, %v345
    %v364 = vunpack.c.l.b16 %v325
    %v365 = vunpack.c.l.b16 %v326
    %v366 = vunpack.c.l.b16 %v327
    %v367 = vunpack.c.l.b16 %v328
    %v368 = vunpack.c.l.b16 %v329
    %v369 = vunpack.c.l.b16 %v330
    %v370 = vunpack.c.l.b16 %v331
    %v371 = vunpack.c.l.b16 %v332
    %v372 = vunpack.c.l.b16 %v333
    %v373 = vunpack.c.l.b16 %v334
    %v374 = vunpack.c.l.b16 %v335
    %v375 = vunpack.c.l.b16 %v336
    %v376 = vunpack.c.l.b16 %v337
    %v377 = vunpack.c.l.b16 %v338
    %v378 = vunpack.c.l.b16 %v339
    %v379 = vunpack.c.l.b16 %v340
    %v380 = vpack.c.b16 %v365, %v364
    %v381 = vpack.c.b16 %v367, %v366
    %v382 = vpack.c.b16 %v369, %v368
    %v383 = vpack.c.b16 %v371, %v370
    %v384 = vpack.c.b16 %v373, %v372
    %v385 = vpack.c.b16 %v375, %v374
    %v386 = vpack.c.b16 %v377, %v376
    %v387 = vpack.c.b16 %v379, %v378
    %396 = vmatprep.subr.bf16.mxu0 0
    %397 = vmatpush1.bf16.msra.mxu0 %v387
    %398 = vmatprep.subr.bf16.mxu0 0
    %399 = vmatpush1.bf16.msra.mxu0 %v386
    %400 = vmatprep.subr.bf16.mxu0 0
    %401 = vmatpush1.bf16.msra.mxu0 %v385
    %402 = vmatprep.subr.bf16.mxu0 0
    %403 = vmatpush1.bf16.msra.mxu0 %v384
    %404 = vmatprep.subr.bf16.mxu0 0
    %405 = vmatpush1.bf16.msra.mxu0 %v383
    %406 = vmatprep.subr.bf16.mxu0 0
    %407 = vmatpush1.bf16.msra.mxu0 %v382
    %408 = vmatprep.subr.bf16.mxu0 0
    %409 = vmatpush1.bf16.msra.mxu0 %v381
    %410 = vmatprep.subr.bf16.mxu0 0
    %411 = vmatpush1.bf16.msra.mxu0 %v380
    %412 = vmatprep.subr.bf16.mxu0 0
    %413 = vmatpush2.bf16.msra.mxu0 0
    %414 = vmatprep.subr.bf16.mxu0 0
    %415 = vmatpush2.bf16.msra.mxu0 0
    %416 = vmatprep.subr.bf16.mxu0 0
    %417 = vmatpush2.bf16.msra.mxu0 0
    %418 = vmatprep.subr.bf16.mxu0 0
    %419 = vmatpush2.bf16.msra.mxu0 0
    %420 = vmatprep.subr.bf16.mxu0 0
    %421 = vmatpush2.bf16.msra.mxu0 0
    %422 = vmatprep.subr.bf16.mxu0 0
    %423 = vmatpush2.bf16.msra.mxu0 0
    %424 = vmatprep.subr.bf16.mxu0 0
    %425 = vmatpush2.bf16.msra.mxu0 0
    %426 = vmatprep.subr.bf16.mxu0 0
    %427 = vmatpush2.bf16.msra.mxu0 0
    %428 = vmatprep.mubr.bf16.mxu0 0
    %429 = vmatmul.mubr.bf16.gmra.mxu0 %v324
    %v430 = vpop.f32.mrf.mxu0
    %v431 = vadd.f32 %v346, %v430
    %v432 = vpop.f32.mrf.mxu0
    %v433 = vpop.f32.mrf.mxu0
    %v434 = vadd.f32 %v346, %v433
    %v435 = vpop.f32.mrf.mxu0
    %436 = vdwg.mxu0
    %437 = vst [vmem:[#allocation10] sm:$0xff] %v431
    %438 = vst [vmem:[#allocation10 + $0x8] sm:$0xff] %v434
    // Predicated region
    $region46: #{tpu_custom_call.1} parent=1 // pred_check
      _
    $region47: #{tpu_custom_call.1} parent=1 // pred_check_branch
      %440 = sbr.rel (0) target = $region49
    $region48: #{tpu_custom_call.1} parent=1 // pred_region
      %s442 = ssub.s32 256, 256
      %443 = vsyncadd [#allocation4], %s442
      %s444 = sshll.u32 [#allocation10], 4
      %s445 = int_to_ptr.vmem [resolvable:$true] %s444
      %450 = dma.vmem_to_hbm [thread:$0]  %s445, 256, %s7, [#allocation4], 128, 128, 8
    $region49: #{tpu_custom_call.1} parent=1 // pred_fallthru
      _
    // Predicated region
    $region50: #{tpu_custom_call.1} parent=1 // pred_check
      _
    $region51: #{tpu_custom_call.1} parent=1 // pred_check_branch
      %452 = sbr.rel (0) target = $region53
    $region52: #{tpu_custom_call.1} parent=1 // pred_region
      %453 = dma.done [#allocation4], 256
    $region53: #{tpu_custom_call.1} parent=1 // pred_fallthru
      _
    %454 = vsyncpa [#allocation3], 1
    %455 = vsyncpa [#allocation6], 1
    %456 = vsyncpa [#allocation9], 1
    %457 = vsyncpa [#allocation4], 1

</llo_original>
